<compile_context>
chip_gen: v7x
topology: tpu7x:2x2x1
jax: 0.10.0
libtpu: 0.0.40
codegen_flags: <defaults>
</compile_context>

<pallas_src>
import functools

import jax
import jax.numpy as jnp
from jax.experimental import pallas as pl
from jax.experimental.pallas import tpu as pltpu

BN_EPS = 1e-5
BN_SCALE = (1.0 + BN_EPS) ** -0.5  # eval-mode BN, running_mean=0, running_var=1


# ---------------------------------------------------------------------------
# Fused cell kernel
# ---------------------------------------------------------------------------
def _make_cell_kernel(n_nodes, channels, channels_pp, channels_p, pad_c):
    C, C_pp, C_p, P = channels, channels_pp, channels_p, pad_c

    def kernel(s0_ref, s1_ref, w_ref, out_ref, x_ref):
        # s0_ref: (C_pp, tm)   s1_ref: (C_p, tm)   w_ref: (P, K_total) resident
        # out_ref: (n_nodes, C, tm)   x_ref: VMEM scratch ((n_nodes+1)*P, tm)

        # preproc0 / preproc1: ReLU -> 1x1 conv (BN scale folded into weights,
        # output rows zero-padded to P=8 so every scratch slab is tile-aligned).
        # NOTE: at C=4 the MXU contraction is mostly padding, but this kernel is
        # launch/HBM-bound; at realistic channel counts the same dots are efficient.
        t0 = jnp.dot(w_ref[:, 0:C_pp], jnp.maximum(s0_ref[...], 0.0),
                     preferred_element_type=jnp.float32)
        t1 = jnp.dot(w_ref[:, C_pp:C_pp + C_p], jnp.maximum(s1_ref[...], 0.0),
                     preferred_element_type=jnp.float32)

        # Full 8-sublane-aligned stores of relu(tensors[0..1]) into the scratch.
        x_ref[0:P, :] = jnp.maximum(t0, 0.0)
        x_ref[P:2 * P, :] = jnp.maximum(t1, 0.0)

        node_outs = []
        off = C_pp + C_p
        for d in range(n_nodes):
            kd = (2 + d) * P
            # Edge sum over all predecessors == ONE matmul of the concatenated,
            # zero-padded edge weights against an aligned static scratch slice.
            t = jnp.dot(w_ref[:, off:off + kd], x_ref[0:kd, :],
                        preferred_element_type=jnp.float32)
            node_outs.append(t[:C, :])
            if d + 1 < n_nodes:            # last node's output feeds nothing
                x_ref[(2 + d) * P:(3 + d) * P, :] = jnp.maximum(t, 0.0)
            off += kd

        # One batched store of all node outputs for this (batch, hw-tile) step.
        out_ref[...] = jnp.stack(node_outs, axis=0)

    return kernel


# ---------------------------------------------------------------------------
# Cell forward
# ---------------------------------------------------------------------------
def make_cell_params(key, n_nodes, channels_pp, channels_p, channels):
    """Deterministic synthetic weights (shapes mirror the PyTorch module)."""
    keys = jax.random.split(key, 2 + sum(2 + d for d in range(n_nodes)))
    ki = iter(range(len(keys)))
    params = {
        "preproc0_w": 0.1 * jax.random.normal(
            keys[next(ki)], (channels_pp, channels), jnp.float32),
        "preproc1_w": 0.1 * jax.random.normal(
            keys[next(ki)], (channels_p, channels), jnp.float32),
        "edges": [],
    }
    for d in range(n_nodes):                    # node d sees 2 + d predecessor tensors
        edge_ws = [0.1 * jax.random.normal(
            keys[next(ki)], (channels, channels), jnp.float32)
            for _ in range(2 + d)]
        params["edges"].append(edge_ws)
    return params


@functools.partial(jax.jit, static_argnames=("n_nodes",))
def cell_forward(params, s0, s1, n_nodes):
    """s0, s1: NCHW f32 -> output NCHW with batch = n_nodes * N (torch.cat dim=0)."""
    N, C_pp, H, W = s0.shape
    C_p = s1.shape[1]
    C = params["preproc0_w"].shape[1]
    HW = H * W
    P = ((C + 7) // 8) * 8                      # sublane-tile-padded channel count

    # --- zero-copy layout: NCHW -> (N, C, H*W); N becomes a grid axis ---
    s0_3d = s0.reshape(N, C_pp, HW)
    s1_3d = s1.reshape(N, C_p, HW)

    # --- trace-time weight prep: transpose + fold BN scale + pad + fuse ---
    def prep_in(w):                              # (Cin, C) -> (P, Cin), rows padded
        wt = (w * BN_SCALE).T
        return jnp.pad(wt, ((0, P - C), (0, 0)))

    pieces = [prep_in(params["preproc0_w"]), prep_in(params["preproc1_w"])]
    for d in range(n_nodes):
        for e in params["edges"][d]:             # (C, C) edge weight
            et = (e * BN_SCALE).T
            pieces.append(jnp.pad(et, ((0, P - C), (0, P - C))))   # (P, P)
    w_all = jnp.concatenate(pieces, axis=1)      # (P, K_total), single resident block
    k_total = C_pp + C_p + sum((2 + d) * P for d in range(n_nodes))

    # --- lane tiling over H*W: cdiv grid, no full-problem fallback ---
    # tm capped to keep the per-node contraction operand (<= (n_nodes+1)*P rows
    # x tm lanes) within vreg budget while amortizing per-step overhead.
    tm = HW if HW <= 1024 else 1024
    n_hw = pl.cdiv(HW, tm)
    grid = (N, n_hw)

    in_specs = [
        pl.BlockSpec((None, C_pp, tm), lambda n, j: (n, 0, j)),    # s0 slab
        pl.BlockSpec((None, C_p, tm), lambda n, j: (n, 0, j)),     # s1 slab
        pl.BlockSpec((P, k_total), lambda n, j: (0, 0)),           # resident weights
    ]
    out_specs = pl.BlockSpec((n_nodes, None, C, tm), lambda n, j: (0, n, 0, j))

    out = pl.pallas_call(
        _make_cell_kernel(n_nodes, C, C_pp, C_p, P),
        out_shape=jax.ShapeDtypeStruct((n_nodes, N, C, HW), jnp.float32),
        grid_spec=pltpu.PrefetchScalarGridSpec(
            num_scalar_prefetch=0,
            grid=grid,
            in_specs=in_specs,
            out_specs=out_specs,
            scratch_shapes=[pltpu.VMEM(((n_nodes + 1) * P, tm), jnp.float32)],
        ),
        compiler_params=pltpu.CompilerParams(
            dimension_semantics=("parallel", "parallel")),
    )(s0_3d, s1_3d, w_all)

    # torch.cat(tensors[2:], dim=0): pure reshape, no transpose, no extra copy op.
    return out.reshape(n_nodes * N, C, H, W)


# ---------------------------------------------------------------------------
# Pure-JAX reference (for correctness check only)
# ---------------------------------------------------------------------------
def cell_forward_ref(params, s0, s1, n_nodes):
    def std_conv(x, w):                                          # x NCHW, w (Cin, Cout)
        y = jnp.einsum("nchw,cd->ndhw", jnp.maximum(x, 0.0), w)
        return y * BN_SCALE
    tensors = [std_conv(s0, params["preproc0_w"]),
               std_conv(s1, params["preproc1_w"])]
    for d in range(n_nodes):
        acc = std_conv(tensors[0], params["edges"][d][0])
        for j in range(1, 2 + d):
            acc = acc + std_conv(tensors[j], params["edges"][d][j])
        tensors.append(acc)
    return jnp.concatenate(tensors[2:], axis=0)                  # torch.cat default dim=0


if __name__ == "__main__":
    # Cell(n_nodes=4, channels_pp=4, channels_p=4, channels=4,
    #      reduction_p=False, reduction=False)
    n_nodes, channels_pp, channels_p, channels = 4, 4, 4, 4
    N, H, W = 2, 16, 16

    key = jax.random.PRNGKey(0)
    k_s0, k_s1, k_params = jax.random.split(key, 3)
    s0 = jax.random.normal(k_s0, (N, channels_pp, H, W), jnp.float32)
    s1 = jax.random.normal(k_s1, (N, channels_p, H, W), jnp.float32)
    params = make_cell_params(k_params, n_nodes, channels_pp, channels_p, channels)

    out = cell_forward(params, s0, s1, n_nodes)
    jax.block_until_ready(out)
    assert out.shape == (n_nodes * N, channels, H, W), out.shape

    ref = cell_forward_ref(params, s0, s1, n_nodes)
    max_err = float(jnp.max(jnp.abs(out - ref)))
    assert max_err < 1e-3, f"mismatch vs reference: {max_err}"
    print("KERNEL_OK")
</pallas_src>

<mosaic_0001>
module attributes {stable_mosaic.version = 11 : i64} {
  func.func @kernel(%arg0: i32, %arg1: i32, %arg2: memref<1x4x256xf32, #tpu.memory_space<vmem>>, %arg3: memref<1x4x256xf32, #tpu.memory_space<vmem>>, %arg4: memref<8x120xf32, #tpu.memory_space<vmem>>, %arg5: memref<4x1x4x256xf32, #tpu.memory_space<vmem>>, %arg6: memref<40x256xf32, #tpu.memory_space<vmem>>) attributes {dimension_semantics = [#tpu.dimension_semantics<parallel>, #tpu.dimension_semantics<parallel>], iteration_bounds = array<i64: 2, 1>, scalar_prefetch = 0 : i64, scratch_operands = 1 : i64, tpu.core_type = #tpu.core_type<tc>, window_params = [{transform_indices = @transform_0, window_bounds = array<i64: 1, 4, 256>}, {transform_indices = @transform_1, window_bounds = array<i64: 1, 4, 256>}, {pipeline_mode = #tpu.pipeline_mode<synchronous>, transform_indices = @transform_2, window_bounds = array<i64: 8, 120>}, {transform_indices = @transform_3, window_bounds = array<i64: 4, 1, 4, 256>}]} {
    %c0 = arith.constant 0 : index
    %c0_0 = arith.constant 0 : index
    %0 = vector.load %arg4[%c0, %c0_0] : memref<8x120xf32, #tpu.memory_space<vmem>>, vector<8x4xf32>
    %c0_1 = arith.constant 0 : index
    %c0_2 = arith.constant 0 : index
    %c0_3 = arith.constant 0 : index
    %1 = vector.load %arg2[%c0_1, %c0_2, %c0_3] : memref<1x4x256xf32, #tpu.memory_space<vmem>>, vector<1x4x256xf32>
    %2 = vector.shape_cast %1 : vector<1x4x256xf32> to vector<4x256xf32>
    %cst = arith.constant 0.000000e+00 : f32
    %3 = vector.broadcast %cst : f32 to vector<4x256xf32>
    %4 = arith.maximumf %2, %3 : vector<4x256xf32>
    %cst_4 = arith.constant dense<0.000000e+00> : vector<8x256xf32>
    %5 = tpu.matmul %0, %4, %cst_4 {dimension_numbers = #tpu.dot_dimension_numbers<[1], [0], [0], [1], [0, 0, 1, 1], [], []>} : vector<8x4xf32>, vector<4x256xf32>, vector<8x256xf32> -> vector<8x256xf32>
    %c0_5 = arith.constant 0 : index
    %c4 = arith.constant 4 : index
    %6 = vector.load %arg4[%c0_5, %c4] : memref<8x120xf32, #tpu.memory_space<vmem>>, vector<8x4xf32>
    %c0_6 = arith.constant 0 : index
    %c0_7 = arith.constant 0 : index
    %c0_8 = arith.constant 0 : index
    %7 = vector.load %arg3[%c0_6, %c0_7, %c0_8] : memref<1x4x256xf32, #tpu.memory_space<vmem>>, vector<1x4x256xf32>
    %8 = vector.shape_cast %7 : vector<1x4x256xf32> to vector<4x256xf32>
    %cst_9 = arith.constant 0.000000e+00 : f32
    %9 = vector.broadcast %cst_9 : f32 to vector<4x256xf32>
    %10 = arith.maximumf %8, %9 : vector<4x256xf32>
    %cst_10 = arith.constant dense<0.000000e+00> : vector<8x256xf32>
    %11 = tpu.matmul %6, %10, %cst_10 {dimension_numbers = #tpu.dot_dimension_numbers<[1], [0], [0], [1], [0, 0, 1, 1], [], []>} : vector<8x4xf32>, vector<4x256xf32>, vector<8x256xf32> -> vector<8x256xf32>
    %cst_11 = arith.constant 0.000000e+00 : f32
    %12 = vector.broadcast %cst_11 : f32 to vector<8x256xf32>
    %13 = arith.maximumf %5, %12 : vector<8x256xf32>
    %c0_12 = arith.constant 0 : index
    %c0_13 = arith.constant 0 : index
    %14 = vector.load %arg6[%c0_12, %c0_13] : memref<40x256xf32, #tpu.memory_space<vmem>>, vector<8x256xf32>
    tpu.vector_store %arg6[%c0_12, %c0_13], %13 {strides = array<i32>} : memref<40x256xf32, #tpu.memory_space<vmem>>, vector<8x256xf32>,
    %cst_14 = arith.constant 0.000000e+00 : f32
    %15 = vector.broadcast %cst_14 : f32 to vector<8x256xf32>
    %16 = arith.maximumf %11, %15 : vector<8x256xf32>
    %c8 = arith.constant 8 : index
    %c0_15 = arith.constant 0 : index
    %17 = vector.load %arg6[%c8, %c0_15] : memref<40x256xf32, #tpu.memory_space<vmem>>, vector<8x256xf32>
    tpu.vector_store %arg6[%c8, %c0_15], %16 {strides = array<i32>} : memref<40x256xf32, #tpu.memory_space<vmem>>, vector<8x256xf32>,
    %c0_16 = arith.constant 0 : index
    %c8_17 = arith.constant 8 : index
    %18 = vector.load %arg4[%c0_16, %c8_17] : memref<8x120xf32, #tpu.memory_space<vmem>>, vector<8x16xf32>
    %c0_18 = arith.constant 0 : index
    %c0_19 = arith.constant 0 : index
    %19 = vector.load %arg6[%c0_18, %c0_19] : memref<40x256xf32, #tpu.memory_space<vmem>>, vector<16x256xf32>
    %cst_20 = arith.constant dense<0.000000e+00> : vector<8x256xf32>
    %20 = tpu.matmul %18, %19, %cst_20 {dimension_numbers = #tpu.dot_dimension_numbers<[1], [0], [0], [1], [0, 0, 1, 1], [], []>} : vector<8x16xf32>, vector<16x256xf32>, vector<8x256xf32> -> vector<8x256xf32>
    %21 = vector.extract_strided_slice %20 {offsets = [0, 0], sizes = [4, 256], strides = [1, 1]} : vector<8x256xf32> to vector<4x256xf32>
    %cst_21 = arith.constant 0.000000e+00 : f32
    %22 = vector.broadcast %cst_21 : f32 to vector<8x256xf32>
    %23 = arith.maximumf %20, %22 : vector<8x256xf32>
    %c16 = arith.constant 16 : index
    %c0_22 = arith.constant 0 : index
    %24 = vector.load %arg6[%c16, %c0_22] : memref<40x256xf32, #tpu.memory_space<vmem>>, vector<8x256xf32>
    tpu.vector_store %arg6[%c16, %c0_22], %23 {strides = array<i32>} : memref<40x256xf32, #tpu.memory_space<vmem>>, vector<8x256xf32>,
    %c0_23 = arith.constant 0 : index
    %c24 = arith.constant 24 : index
    %25 = vector.load %arg4[%c0_23, %c24] : memref<8x120xf32, #tpu.memory_space<vmem>>, vector<8x24xf32>
    %c0_24 = arith.constant 0 : index
    %c0_25 = arith.constant 0 : index
    %26 = vector.load %arg6[%c0_24, %c0_25] : memref<40x256xf32, #tpu.memory_space<vmem>>, vector<24x256xf32>
    %cst_26 = arith.constant dense<0.000000e+00> : vector<8x256xf32>
    %27 = tpu.matmul %25, %26, %cst_26 {dimension_numbers = #tpu.dot_dimension_numbers<[1], [0], [0], [1], [0, 0, 1, 1], [], []>} : vector<8x24xf32>, vector<24x256xf32>, vector<8x256xf32> -> vector<8x256xf32>
    %28 = vector.extract_strided_slice %27 {offsets = [0, 0], sizes = [4, 256], strides = [1, 1]} : vector<8x256xf32> to vector<4x256xf32>
    %cst_27 = arith.constant 0.000000e+00 : f32
    %29 = vector.broadcast %cst_27 : f32 to vector<8x256xf32>
    %30 = arith.maximumf %27, %29 : vector<8x256xf32>
    %c24_28 = arith.constant 24 : index
    %c0_29 = arith.constant 0 : index
    %31 = vector.load %arg6[%c24_28, %c0_29] : memref<40x256xf32, #tpu.memory_space<vmem>>, vector<8x256xf32>
    tpu.vector_store %arg6[%c24_28, %c0_29], %30 {strides = array<i32>} : memref<40x256xf32, #tpu.memory_space<vmem>>, vector<8x256xf32>,
    %c0_30 = arith.constant 0 : index
    %c48 = arith.constant 48 : index
    %32 = vector.load %arg4[%c0_30, %c48] : memref<8x120xf32, #tpu.memory_space<vmem>>, vector<8x32xf32>
    %c0_31 = arith.constant 0 : index
    %c0_32 = arith.constant 0 : index
    %33 = vector.load %arg6[%c0_31, %c0_32] : memref<40x256xf32, #tpu.memory_space<vmem>>, vector<32x256xf32>
    %cst_33 = arith.constant dense<0.000000e+00> : vector<8x256xf32>
    %34 = tpu.matmul %32, %33, %cst_33 {dimension_numbers = #tpu.dot_dimension_numbers<[1], [0], [0], [1], [0, 0, 1, 1], [], []>} : vector<8x32xf32>, vector<32x256xf32>, vector<8x256xf32> -> vector<8x256xf32>
    %35 = vector.extract_strided_slice %34 {offsets = [0, 0], sizes = [4, 256], strides = [1, 1]} : vector<8x256xf32> to vector<4x256xf32>
    %cst_34 = arith.constant 0.000000e+00 : f32
    %36 = vector.broadcast %cst_34 : f32 to vector<8x256xf32>
    %37 = arith.maximumf %34, %36 : vector<8x256xf32>
    %c32 = arith.constant 32 : index
    %c0_35 = arith.constant 0 : index
    %38 = vector.load %arg6[%c32, %c0_35] : memref<40x256xf32, #tpu.memory_space<vmem>>, vector<8x256xf32>
    tpu.vector_store %arg6[%c32, %c0_35], %37 {strides = array<i32>} : memref<40x256xf32, #tpu.memory_space<vmem>>, vector<8x256xf32>,
    %c0_36 = arith.constant 0 : index
    %c80 = arith.constant 80 : index
    %39 = vector.load %arg4[%c0_36, %c80] : memref<8x120xf32, #tpu.memory_space<vmem>>, vector<8x40xf32>
    %c0_37 = arith.constant 0 : index
    %c0_38 = arith.constant 0 : index
    %40 = vector.load %arg6[%c0_37, %c0_38] : memref<40x256xf32, #tpu.memory_space<vmem>>, vector<40x256xf32>
    %cst_39 = arith.constant dense<0.000000e+00> : vector<8x256xf32>
    %41 = tpu.matmul %39, %40, %cst_39 {dimension_numbers = #tpu.dot_dimension_numbers<[1], [0], [0], [1], [0, 0, 1, 1], [], []>} : vector<8x40xf32>, vector<40x256xf32>, vector<8x256xf32> -> vector<8x256xf32>
    %42 = vector.extract_strided_slice %41 {offsets = [0, 0], sizes = [4, 256], strides = [1, 1]} : vector<8x256xf32> to vector<4x256xf32>
    %43 = vector.shape_cast %21 : vector<4x256xf32> to vector<1x4x256xf32>
    %44 = vector.shape_cast %28 : vector<4x256xf32> to vector<1x4x256xf32>
    %45 = vector.shape_cast %35 : vector<4x256xf32> to vector<1x4x256xf32>
    %46 = vector.shape_cast %42 : vector<4x256xf32> to vector<1x4x256xf32>
    %47 = tpu.concatenate %43, %44, %45, %46 in 0 : vector<1x4x256xf32>, vector<1x4x256xf32>, vector<1x4x256xf32>, vector<1x4x256xf32> -> vector<4x4x256xf32>
    %c0_40 = arith.constant 0 : index
    %c0_41 = arith.constant 0 : index
    %c0_42 = arith.constant 0 : index
    %c0_43 = arith.constant 0 : index
    %48 = vector.load %arg5[%c0_40, %c0_41, %c0_42, %c0_43] : memref<4x1x4x256xf32, #tpu.memory_space<vmem>>, vector<4x1x4x256xf32>
    %49 = vector.shape_cast %48 : vector<4x1x4x256xf32> to vector<4x4x256xf32>
    %50 = vector.shape_cast %47 : vector<4x4x256xf32> to vector<4x1x4x256xf32>
    tpu.vector_store %arg5[%c0_40, %c0_41, %c0_42, %c0_43], %50 {strides = array<i32>} : memref<4x1x4x256xf32, #tpu.memory_space<vmem>>, vector<4x1x4x256xf32>,
    return
  }
  func.func @transform_0(%arg0: i32, %arg1: i32) -> (i32, i32, i32) {
    %c0_i32 = arith.constant 0 : i32
    %c0_i32_0 = arith.constant 0 : i32
    return %arg0, %c0_i32, %arg1 : i32, i32, i32
  }
  func.func @transform_1(%arg0: i32, %arg1: i32) -> (i32, i32, i32) {
    %c0_i32 = arith.constant 0 : i32
    %c0_i32_0 = arith.constant 0 : i32
    return %arg0, %c0_i32, %arg1 : i32, i32, i32
  }
  func.func @transform_2(%arg0: i32, %arg1: i32) -> (i32, i32) {
    %c0_i32 = arith.constant 0 : i32
    %c0_i32_0 = arith.constant 0 : i32
    %c0_i32_1 = arith.constant 0 : i32
    return %c0_i32, %c0_i32_0 : i32, i32
  }
  func.func @transform_3(%arg0: i32, %arg1: i32) -> (i32, i32, i32, i32) {
    %c0_i32 = arith.constant 0 : i32
    %c0_i32_0 = arith.constant 0 : i32
    %c0_i32_1 = arith.constant 0 : i32
    return %c0_i32, %arg0, %c0_i32_0, %arg1 : i32, i32, i32, i32
  }
}

</mosaic_0001>

<llo_original>
// kernel: cell_forward.1
$region0: #{cell_forward.1}
  #allocation0 [shape = 'u32[]', space=smem, size = 0x4, offset = 0x4, fixed_abs, tag = 'smem constant byte address 0x4 - core index']
  #allocation1 [shape = 'u32[144,128]{1,0:T(1,128)}', space=vmem, size = 0x12000, scoped, tag = 'internal scratch']
  #allocation2 [shape = 'f32[40,256]{1,0:T(8,128)}', space=vmem, size = 0xa000, scoped, tag = 'scratch operand']
  %s0 = inlined_call_operand.vmem [shape: f32[2,4,256], index: 0, kind: input, shape index: {}]
  %s1 = inlined_call_operand.vmem [shape: f32[2,4,256], index: 1, kind: input, shape index: {}]
  %s2 = inlined_call_operand.vmem [shape: f32[8,120], index: 2, kind: input, shape index: {}]
  %s3 = inlined_call_operand.vmem [shape: f32[4,2,4,256], index: 3, kind: output, shape index: {}]
  %s4 = sld [smem:[#allocation0]]
  $region79: #{cell_forward.1} parent=0
    _
  %s6 = ssub.s32 1, %s4
  %s7 = scalar_select 0, %s6, %s4
  $region1: #{cell_forward.1} parent=0
    #allocation3 [shape = 'u8[32768]{0}', space=vmem, size = 0x8000, scoped, tag = 'output window, operand 0']
    loop: start=0, step=1, limit=4
    $region2: #{cell_forward.1} parent=1 // loop_pre_header
      _
    $region3: #{cell_forward.1} parent=1 // loop_header
      %s9 = sphi 0, %s13
      %p10 = scmp.ge.s32.totalorder %s9, 4
      %s16 = sphi 0, %s28
      %s17 = sphi 0, %s24
      %s18 = sphi 0, %s16
      %s19 = sphi 0, %s17
      %s20 = sphi 0, %s18
      %s21 = sphi 0, %s19
      %s33 = sphi 0, %s35
      %s36 = sphi 0, %s33
      %s37 = sphi 0, %s36
      %s53 = sphi 0, %s37
      %s61 = sphi 0, %s63
      %s64 = sphi 0, %s61
      %s65 = sphi 0, %s64
      %s81 = sphi 0, %s65
      %s85 = sphi 0, %s85
      %s87 = sphi 0, %s85
      %s88 = sphi 0, %s87
      %s102 = sphi 0, %s88
      %s110 = sphi 0, %s112
      %s113 = sphi 0, %s110
      %s114 = sphi 0, %s113
      %s130 = sphi 0, %s114
    $region4: #{cell_forward.1} parent=1 // loop_header_branch
      %12 = sbr.rel (%p10) target = $region8
    $region5: #{cell_forward.1} parent=1 // loop_body
      %s14 = ssub.s32 %s9, 1
      %s15 = ssub.s32 %s9, 2
      %s22 = sadd.s32 1, %s17
      %p23 = scmp.ge.s32.totalorder %s22, 1
      %s24 = scalar_select %p23, 0, %s22
      %s25 = sadd.s32 1, %s16
      %s26 = scalar_select %p23, %s25, %s16
      %p27 = scmp.ge.s32.totalorder %s26, 2
      %s28 = scalar_select %p27, 0, %s26
      %s29 = ssub.s32 %s16, %s28
      %s30 = ssub.s32 %s17, %s24
      %s31 = sor.u32 %s29, %s30
      %p32 = scmp.eq.s32.totalorder %s31, 0
      %s34 = sadd.s32 %s33, 1
      %s35 = scalar_select %p32, %s33, %s34
      %p38 = pneg %p32
      %p39 = scmp.eq.s32.totalorder %s9, 1
      %p40 = por %p38, %p39
      %p41 = scmp.ne.s32.totalorder %s33, %s36
      %p42 = scmp.eq.s32.totalorder %s9, 0
      %p43 = por %p41, %p42
      %p44 = scmp.ne.s32.totalorder %s33, %s36
      %p45 = scmp.eq.s32.totalorder %s14, 1
      %p46 = por %p44, %p45
      %p47 = scmp.ne.s32.totalorder %s36, %s37
      %p48 = scmp.eq.s32.totalorder %s14, 0
      %p49 = por %p47, %p48
      %p50 = scmp.ne.s32.totalorder %s36, %s37
      %p51 = scmp.eq.s32.totalorder %s15, 1
      %p52 = por %p50, %p51
      %p54 = scmp.ne.s32.totalorder %s37, %s53
      %p55 = scmp.eq.s32.totalorder %s15, 0
      %p56 = por %p54, %p55
      %s57 = ssub.s32 %s16, %s28
      %s58 = ssub.s32 %s17, %s24
      %s59 = sor.u32 %s57, %s58
      %p60 = scmp.eq.s32.totalorder %s59, 0
      %s62 = sadd.s32 %s61, 1
      %s63 = scalar_select %p60, %s61, %s62
      %p66 = pneg %p60
      %p67 = scmp.eq.s32.totalorder %s9, 1
      %p68 = por %p66, %p67
      %p69 = scmp.ne.s32.totalorder %s61, %s64
      %p70 = scmp.eq.s32.totalorder %s9, 0
      %p71 = por %p69, %p70
      %p72 = scmp.ne.s32.totalorder %s61, %s64
      %p73 = scmp.eq.s32.totalorder %s14, 1
      %p74 = por %p72, %p73
      %p75 = scmp.ne.s32.totalorder %s64, %s65
      %p76 = scmp.eq.s32.totalorder %s14, 0
      %p77 = por %p75, %p76
      %p78 = scmp.ne.s32.totalorder %s64, %s65
      %p79 = scmp.eq.s32.totalorder %s15, 1
      %p80 = por %p78, %p79
      %p82 = scmp.ne.s32.totalorder %s65, %s81
      %p83 = scmp.eq.s32.totalorder %s15, 0
      %p84 = por %p82, %p83
      %s86 = sadd.s32 %s85, 1
      %p89 = scmp.eq.s32.totalorder %s9, 1
      %p90 = scmp.ne.s32.totalorder %s85, %s87
      %p91 = scmp.eq.s32.totalorder %s9, 0
      %p92 = por %p90, %p91
      %p93 = scmp.ne.s32.totalorder %s85, %s87
      %p94 = scmp.eq.s32.totalorder %s14, 1
      %p95 = por %p93, %p94
      %p96 = scmp.ne.s32.totalorder %s87, %s88
      %p97 = scmp.eq.s32.totalorder %s14, 0
      %p98 = por %p96, %p97
      %p99 = scmp.ne.s32.totalorder %s87, %s88
      %p100 = scmp.eq.s32.totalorder %s15, 1
      %p101 = por %p99, %p100
      %p103 = scmp.ne.s32.totalorder %s88, %s102
      %p104 = scmp.eq.s32.totalorder %s15, 0
      %p105 = por %p103, %p104
      %s106 = ssub.s32 %s16, %s28
      %s107 = ssub.s32 %s17, %s24
      %s108 = sor.u32 %s106, %s107
      %p109 = scmp.eq.s32.totalorder %s108, 0
      %s111 = sadd.s32 %s110, 1
      %s112 = scalar_select %p109, %s110, %s111
      %p115 = pneg %p109
      %p116 = scmp.eq.s32.totalorder %s9, 1
      %p117 = por %p115, %p116
      %p118 = scmp.ne.s32.totalorder %s110, %s113
      %p119 = scmp.eq.s32.totalorder %s9, 0
      %p120 = por %p118, %p119
      %p121 = scmp.ne.s32.totalorder %s110, %s113
      %p122 = scmp.eq.s32.totalorder %s14, 1
      %p123 = por %p121, %p122
      %p124 = scmp.ne.s32.totalorder %s113, %s114
      %p125 = scmp.eq.s32.totalorder %s14, 0
      %p126 = por %p124, %p125
      %p127 = scmp.ne.s32.totalorder %s113, %s114
      %p128 = scmp.eq.s32.totalorder %s15, 1
      %p129 = por %p127, %p128
      %p131 = scmp.ne.s32.totalorder %s114, %s130
      %p132 = scmp.eq.s32.totalorder %s15, 0
      %p133 = por %p131, %p132
      %p134 = scmp.le.s32.totalorder 1, %s9
      %p135 = scmp.lt.s32.totalorder %s9, 3
      %p136 = pnand %p134, %p135
      %p137 = pneg %p136
      // Predicated region
      $region9: #{cell_forward.1} parent=5 // pred_check
        _
      $region10: #{cell_forward.1} parent=5 // pred_check_branch
        %139 = sbr.rel (%p136) target = $region12
      $region11: #{cell_forward.1} parent=5 // pred_region
        %s140 = ssub.s32 %s9, 1
        // Predicated region
        $region13: #{cell_forward.1} parent=11 // pred_check
          %p141 = pneg %p98
        $region14: #{cell_forward.1} parent=11 // pred_check_branch
          %143 = sbr.rel (%p141) target = $region16
        $region15: #{cell_forward.1} parent=11 // pred_region
          _
        $region16: #{cell_forward.1} parent=11 // pred_fallthru
          _
      $region12: #{cell_forward.1} parent=5 // pred_fallthru
        _
      %p144 = scmp.lt.s32.totalorder %s9, 2
      // Predicated region
      $region17: #{cell_forward.1} parent=5 // pred_check
        %p145 = pneg %p144
      $region18: #{cell_forward.1} parent=5 // pred_check_branch
        %147 = sbr.rel (%p145) target = $region20
      $region19: #{cell_forward.1} parent=5 // pred_region
        // Predicated region
        $region21: #{cell_forward.1} parent=19 // pred_check
          %p148 = pneg %p43
        $region22: #{cell_forward.1} parent=19 // pred_check_branch
          %150 = sbr.rel (%p148) target = $region24
        $region23: #{cell_forward.1} parent=19 // pred_region
          %s151 = smul.u32 2, %s17
          %p152 = scmp.lt.s32.totalorder %s16, 1
          %s153 = scalar_select %p152, %s16, 1
          %p154 = scmp.lt.s32.totalorder %s151, 1
          %s155 = scalar_select %p154, %s151, 1
          %s156 = smul.addr %s153, 2
          %s157 = sadd.s32 %s155, %s156
          %s158 = smul.addr %s157, 4
          %s159 = scalar_lea.vmem %s0, %s158
          %s160 = smul.u32 2, %s17
        $region24: #{cell_forward.1} parent=19 // pred_fallthru
          _
        // Predicated region
        $region25: #{cell_forward.1} parent=19 // pred_check
          %p161 = pneg %p71
        $region26: #{cell_forward.1} parent=19 // pred_check_branch
          %163 = sbr.rel (%p161) target = $region28
        $region27: #{cell_forward.1} parent=19 // pred_region
          %s164 = smul.u32 2, %s17
          %p165 = scmp.lt.s32.totalorder %s16, 1
          %s166 = scalar_select %p165, %s16, 1
          %p167 = scmp.lt.s32.totalorder %s164, 1
          %s168 = scalar_select %p167, %s164, 1
          %s169 = smul.addr %s166, 2
          %s170 = sadd.s32 %s168, %s169
          %s171 = smul.addr %s170, 4
          %s172 = scalar_lea.vmem %s1, %s171
          %s173 = smul.u32 2, %s17
        $region28: #{cell_forward.1} parent=19 // pred_fallthru
          _
      $region20: #{cell_forward.1} parent=5 // pred_fallthru
        _
      %p174 = scmp.le.s32.totalorder 1, %s9
      %p175 = scmp.lt.s32.totalorder %s9, 3
      %p176 = pnand %p174, %p175
      %p177 = pneg %p176
      // Predicated region
      $region29: #{cell_forward.1} parent=5 // pred_check
        _
      $region30: #{cell_forward.1} parent=5 // pred_check_branch
        %179 = sbr.rel (%p176) target = $region32
      $region31: #{cell_forward.1} parent=5 // pred_region
        %s180 = ssub.s32 %s9, 1
        %s181 = smul.u32 2, %s19
        %p182 = scmp.lt.s32.totalorder %s18, 1
        %s183 = scalar_select %p182, %s18, 1
        %p184 = scmp.lt.s32.totalorder %s181, 1
        %s185 = scalar_select %p184, %s181, 1
        %s186 = smul.addr %s183, 2
        %s187 = sadd.s32 %s185, %s186
        %s188 = smul.addr %s187, 4
        %s189 = scalar_lea.vmem %s0, %s188
        %p190 = pneg %p49
        %p191 = pneg %p46
        %s192 = smul.u32 2, %s19
        %p193 = scmp.lt.s32.totalorder %s18, 1
        %s194 = scalar_select %p193, %s18, 1
        %p195 = scmp.lt.s32.totalorder %s192, 1
        %s196 = scalar_select %p195, %s192, 1
        %s197 = smul.addr %s194, 2
        %s198 = sadd.s32 %s196, %s197
        %s199 = smul.addr %s198, 4
        %s200 = scalar_lea.vmem %s1, %s199
        %p201 = pneg %p77
        %p202 = pneg %p74
        %p203 = pneg %p98
        %p204 = pneg %p95
        %p205 = pneg %p126
        %p206 = pneg %p123
        %s207 = sand.u32 %s113, 1
        %s208 = sand.u32 %s113, 1
        %s209 = smul.addr %s208, 32
        %s210 = scalar_lea.vmem [#allocation3], %s209
        %s211 = smul.u32 2, %s19
        %p212 = scmp.lt.s32.totalorder %s18, 1
        %s213 = scalar_select %p212, %s18, 1
        %p214 = scmp.lt.s32.totalorder %s211, 1
        %s215 = scalar_select %p214, %s211, 1
        %s216 = smul.addr %s213, 2
        %s217 = sadd.s32 %s215, %s216
        %s218 = smul.addr %s217, 4
        %s219 = scalar_lea.vmem %s0, %s218
        %s220 = smul.u32 2, %s19
        %s221 = smul.u32 2, %s19
        %p222 = scmp.lt.s32.totalorder %s18, 1
        %s223 = scalar_select %p222, %s18, 1
        %p224 = scmp.lt.s32.totalorder %s221, 1
        %s225 = scalar_select %p224, %s221, 1
        %s226 = smul.addr %s223, 2
        %s227 = sadd.s32 %s225, %s226
        %s228 = smul.addr %s227, 4
        %s229 = scalar_lea.vmem %s1, %s228
        %s230 = smul.u32 2, %s19
        %s231 = smul.u32 2, %s19
        %v232 = vld [vmem:[%s2] sm:$0xff]
        %v233 = vld [vmem:[%s219] sm:$0xff]
        %v234 = vmax.f32 %v233, 0.0
        %v236 = vcombine.high %v234, %v234
        %vm237 = vcmask 31744
        %v239 = vsel %vm237, %v232, 0
        %vm241 = vcmask 1043456
        %v242 = vsel %vm241, %v234, 0
        %v244 = vsel %vm241, %v236, 0
        %246 = vmatprep.subr.mxu0 %v244
        %247 = vmatpush1.msra.mxu0 %v242
        %248 = vmatprep.subr.mxu0 0.0
        %249 = vmatpush1.msra.mxu0 0.0
        %250 = vmatprep.subr.mxu0 0.0
        %251 = vmatpush1.msra.mxu0 0.0
        %252 = vmatprep.subr.mxu0 0.0
        %253 = vmatpush1.msra.mxu0 0.0
        %254 = vmatprep.subr.mxu0 0.0
        %255 = vmatpush1.msra.mxu0 0.0
        %256 = vmatprep.subr.mxu0 0.0
        %257 = vmatpush1.msra.mxu0 0.0
        %258 = vmatprep.subr.mxu0 0.0
        %259 = vmatpush1.msra.mxu0 0.0
        %260 = vmatprep.subr.mxu0 0.0
        %261 = vmatpush1.msra.mxu0 0.0
        %262 = vmatprep.subr.mxu0 0.0
        %263 = vmatpush1.msra.mxu0 0.0
        %264 = vmatprep.subr.mxu0 0.0
        %265 = vmatpush1.msra.mxu0 0.0
        %266 = vmatprep.subr.mxu0 0.0
        %267 = vmatpush1.msra.mxu0 0.0
        %268 = vmatprep.subr.mxu0 0.0
        %269 = vmatpush1.msra.mxu0 0.0
        %270 = vmatprep.subr.mxu0 0.0
        %271 = vmatpush1.msra.mxu0 0.0
        %272 = vmatprep.subr.mxu0 0.0
        %273 = vmatpush1.msra.mxu0 0.0
        %274 = vmatprep.subr.mxu0 0.0
        %275 = vmatpush1.msra.mxu0 0.0
        %276 = vmatprep.subr.mxu0 0.0
        %277 = vmatpush1.msra.mxu0 0.0
        %278 = vmatprep.subr.mxu0 0.0
        %279 = vmatpush1.msra.mxu0 0.0
        %280 = vmatprep.subr.mxu0 0.0
        %281 = vmatpush1.msra.mxu0 0.0
        %282 = vmatprep.subr.mxu0 0.0
        %283 = vmatpush1.msra.mxu0 0.0
        %284 = vmatprep.subr.mxu0 0.0
        %285 = vmatpush1.msra.mxu0 0.0
        %286 = vmatprep.subr.mxu0 0.0
        %287 = vmatpush1.msra.mxu0 0.0
        %288 = vmatprep.subr.mxu0 0.0
        %289 = vmatpush1.msra.mxu0 0.0
        %290 = vmatprep.subr.mxu0 0.0
        %291 = vmatpush1.msra.mxu0 0.0
        %292 = vmatprep.subr.mxu0 0.0
        %293 = vmatpush1.msra.mxu0 0.0
        %294 = vmatprep.subr.mxu0 0.0
        %295 = vmatpush1.msra.mxu0 0.0
        %296 = vmatprep.subr.mxu0 0.0
        %297 = vmatpush1.msra.mxu0 0.0
        %298 = vmatprep.subr.mxu0 0.0
        %299 = vmatpush1.msra.mxu0 0.0
        %300 = vmatprep.subr.mxu0 0.0
        %301 = vmatpush1.msra.mxu0 0.0
        %302 = vmatprep.subr.mxu0 0.0
        %303 = vmatpush1.msra.mxu0 0.0
        %304 = vmatprep.subr.mxu0 0.0
        %305 = vmatpush1.msra.mxu0 0.0
        %306 = vmatprep.subr.mxu0 0.0
        %307 = vmatpush1.msra.mxu0 0.0
        %308 = vmatprep.subr.mxu0 0.0
        %309 = vmatpush1.msra.mxu0 0.0
        %310 = vmatprep.mubr.f32.mxu0 0.0
        %311 = vmatmul.mubr.f32.gmra.mrb[0].mxu0 %v239
        %v312 = vpop.f32.mrb[0].mxu0
        %v313 = vadd.f32 0.0, %v312
        %v314 = vpop.f32.mrb[0].mxu0
        %v315 = vadd.f32 0.0, %v314
        %316 = vdwg.mxu0
        %v317 = vld [vmem:[%s2] sm:$0xff]
        %v318 = vld [vmem:[%s229] sm:$0xff]
        %v319 = vmax.f32 %v318, 0.0
        %321 = vrot.lane.b32.xlu0 %v317, 124
        %v322 = vpop.permute.xlu0 %321
        %v324 = vcombine.high %v319, %v319
        %v325 = vsel %vm237, %v322, 0
        %v327 = vsel %vm241, %v319, 0
        %v329 = vsel %vm241, %v324, 0
        %331 = vmatprep.subr.mxu0 %v329
        %332 = vmatpush1.msra.mxu0 %v327
        %333 = vmatprep.subr.mxu0 0.0
        %334 = vmatpush1.msra.mxu0 0.0
        %335 = vmatprep.subr.mxu0 0.0
        %336 = vmatpush1.msra.mxu0 0.0
        %337 = vmatprep.subr.mxu0 0.0
        %338 = vmatpush1.msra.mxu0 0.0
        %339 = vmatprep.subr.mxu0 0.0
        %340 = vmatpush1.msra.mxu0 0.0
        %341 = vmatprep.subr.mxu0 0.0
        %342 = vmatpush1.msra.mxu0 0.0
        %343 = vmatprep.subr.mxu0 0.0
        %344 = vmatpush1.msra.mxu0 0.0
        %345 = vmatprep.subr.mxu0 0.0
        %346 = vmatpush1.msra.mxu0 0.0
        %347 = vmatprep.subr.mxu0 0.0
        %348 = vmatpush1.msra.mxu0 0.0
        %349 = vmatprep.subr.mxu0 0.0
        %350 = vmatpush1.msra.mxu0 0.0
        %351 = vmatprep.subr.mxu0 0.0
        %352 = vmatpush1.msra.mxu0 0.0
        %353 = vmatprep.subr.mxu0 0.0
        %354 = vmatpush1.msra.mxu0 0.0
        %355 = vmatprep.subr.mxu0 0.0
        %356 = vmatpush1.msra.mxu0 0.0
        %357 = vmatprep.subr.mxu0 0.0
        %358 = vmatpush1.msra.mxu0 0.0
        %359 = vmatprep.subr.mxu0 0.0
        %360 = vmatpush1.msra.mxu0 0.0
        %361 = vmatprep.subr.mxu0 0.0
        %362 = vmatpush1.msra.mxu0 0.0
        %363 = vmatprep.subr.mxu0 0.0
        %364 = vmatpush1.msra.mxu0 0.0
        %365 = vmatprep.subr.mxu0 0.0
        %366 = vmatpush1.msra.mxu0 0.0
        %367 = vmatprep.subr.mxu0 0.0
        %368 = vmatpush1.msra.mxu0 0.0
        %369 = vmatprep.subr.mxu0 0.0
        %370 = vmatpush1.msra.mxu0 0.0
        %371 = vmatprep.subr.mxu0 0.0
        %372 = vmatpush1.msra.mxu0 0.0
        %373 = vmatprep.subr.mxu0 0.0
        %374 = vmatpush1.msra.mxu0 0.0
        %375 = vmatprep.subr.mxu0 0.0
        %376 = vmatpush1.msra.mxu0 0.0
        %377 = vmatprep.subr.mxu0 0.0
        %378 = vmatpush1.msra.mxu0 0.0
        %379 = vmatprep.subr.mxu0 0.0
        %380 = vmatpush1.msra.mxu0 0.0
        %381 = vmatprep.subr.mxu0 0.0
        %382 = vmatpush1.msra.mxu0 0.0
        %383 = vmatprep.subr.mxu0 0.0
        %384 = vmatpush1.msra.mxu0 0.0
        %385 = vmatprep.subr.mxu0 0.0
        %386 = vmatpush1.msra.mxu0 0.0
        %387 = vmatprep.subr.mxu0 0.0
        %388 = vmatpush1.msra.mxu0 0.0
        %389 = vmatprep.subr.mxu0 0.0
        %390 = vmatpush1.msra.mxu0 0.0
        %391 = vmatprep.subr.mxu0 0.0
        %392 = vmatpush1.msra.mxu0 0.0
        %393 = vmatprep.subr.mxu0 0.0
        %394 = vmatpush1.msra.mxu0 0.0
        %395 = vmatprep.mubr.f32.mxu0 0.0
        %396 = vmatmul.mubr.f32.gmra.mrb[0].mxu0 %v325
        %v397 = vpop.f32.mrb[0].mxu0
        %v398 = vadd.f32 0.0, %v397
        %v399 = vpop.f32.mrb[0].mxu0
        %v400 = vadd.f32 0.0, %v399
        %401 = vdwg.mxu0
        %v402 = vmax.f32 %v313, 0.0
        %v403 = vmax.f32 %v315, 0.0
        %404 = vst [vmem:[#allocation2] sm:$0xff] %v402
        %405 = vst [vmem:[#allocation2 + $0x8] sm:$0xff] %v403
        %v406 = vmax.f32 %v398, 0.0
        %v407 = vmax.f32 %v400, 0.0
        %408 = vst [vmem:[#allocation2 + $0x10] sm:$0xff] %v406
        %409 = vst [vmem:[#allocation2 + $0x18] sm:$0xff] %v407
        %v410 = vld [vmem:[%s2] sm:$0xff]
        %v411 = vld [vmem:[#allocation2] sm:$0xff]
        %v412 = vld [vmem:[#allocation2 + $0x8] sm:$0xff]
        %v413 = vld [vmem:[#allocation2 + $0x10] sm:$0xff]
        %v414 = vld [vmem:[#allocation2 + $0x18] sm:$0xff]
        %416 = vrot.lane.b32.xlu0 %v410, 120
        %v417 = vpop.permute.xlu0 %416
        %vm418 = vcmask 130048
        %v419 = vsel %vm418, %v417, 0
        %421 = vmatprep.subr.mxu0 %v412
        %422 = vmatpush1.msra.mxu0 %v411
        %423 = vmatprep.subr.mxu0 %v414
        %424 = vmatpush1.msra.mxu0 %v413
        %425 = vmatprep.subr.mxu0 0.0
        %426 = vmatpush1.msra.mxu0 0.0
        %427 = vmatprep.subr.mxu0 0.0
        %428 = vmatpush1.msra.mxu0 0.0
        %429 = vmatprep.subr.mxu0 0.0
        %430 = vmatpush1.msra.mxu0 0.0
        %431 = vmatprep.subr.mxu0 0.0
        %432 = vmatpush1.msra.mxu0 0.0
        %433 = vmatprep.subr.mxu0 0.0
        %434 = vmatpush1.msra.mxu0 0.0
        %435 = vmatprep.subr.mxu0 0.0
        %436 = vmatpush1.msra.mxu0 0.0
        %437 = vmatprep.subr.mxu0 0.0
        %438 = vmatpush1.msra.mxu0 0.0
        %439 = vmatprep.subr.mxu0 0.0
        %440 = vmatpush1.msra.mxu0 0.0
        %441 = vmatprep.subr.mxu0 0.0
        %442 = vmatpush1.msra.mxu0 0.0
        %443 = vmatprep.subr.mxu0 0.0
        %444 = vmatpush1.msra.mxu0 0.0
        %445 = vmatprep.subr.mxu0 0.0
        %446 = vmatpush1.msra.mxu0 0.0
        %447 = vmatprep.subr.mxu0 0.0
        %448 = vmatpush1.msra.mxu0 0.0
        %449 = vmatprep.subr.mxu0 0.0
        %450 = vmatpush1.msra.mxu0 0.0
        %451 = vmatprep.subr.mxu0 0.0
        %452 = vmatpush1.msra.mxu0 0.0
        %453 = vmatprep.subr.mxu0 0.0
        %454 = vmatpush1.msra.mxu0 0.0
        %455 = vmatprep.subr.mxu0 0.0
        %456 = vmatpush1.msra.mxu0 0.0
        %457 = vmatprep.subr.mxu0 0.0
        %458 = vmatpush1.msra.mxu0 0.0
        %459 = vmatprep.subr.mxu0 0.0
        %460 = vmatpush1.msra.mxu0 0.0
        %461 = vmatprep.subr.mxu0 0.0
        %462 = vmatpush1.msra.mxu0 0.0
        %463 = vmatprep.subr.mxu0 0.0
        %464 = vmatpush1.msra.mxu0 0.0
        %465 = vmatprep.subr.mxu0 0.0
        %466 = vmatpush1.msra.mxu0 0.0
        %467 = vmatprep.subr.mxu0 0.0
        %468 = vmatpush1.msra.mxu0 0.0
        %469 = vmatprep.subr.mxu0 0.0
        %470 = vmatpush1.msra.mxu0 0.0
        %471 = vmatprep.subr.mxu0 0.0
        %472 = vmatpush1.msra.mxu0 0.0
        %473 = vmatprep.subr.mxu0 0.0
        %474 = vmatpush1.msra.mxu0 0.0
        %475 = vmatprep.subr.mxu0 0.0
        %476 = vmatpush1.msra.mxu0 0.0
        %477 = vmatprep.subr.mxu0 0.0
        %478 = vmatpush1.msra.mxu0 0.0
        %479 = vmatprep.subr.mxu0 0.0
        %480 = vmatpush1.msra.mxu0 0.0
        %481 = vmatprep.subr.mxu0 0.0
        %482 = vmatpush1.msra.mxu0 0.0
        %483 = vmatprep.subr.mxu0 0.0
        %484 = vmatpush1.msra.mxu0 0.0
        %485 = vmatprep.mubr.f32.mxu0 0.0
        %486 = vmatmul.mubr.f32.gmra.mrb[0].mxu0 %v419
        %v487 = vpop.f32.mrb[0].mxu0
        %v488 = vadd.f32 0.0, %v487
        %v489 = vpop.f32.mrb[0].mxu0
        %v490 = vadd.f32 0.0, %v489
        %491 = vdwg.mxu0
        %v492 = vmax.f32 %v488, 0.0
        %v493 = vmax.f32 %v490, 0.0
        %494 = vst [vmem:[#allocation2 + $0x20] sm:$0xff] %v492
        %495 = vst [vmem:[#allocation2 + $0x28] sm:$0xff] %v493
        %v496 = vld [vmem:[%s2] sm:$0xff]
        %v497 = vld [vmem:[#allocation2] sm:$0xff]
        %v498 = vld [vmem:[#allocation2 + $0x8] sm:$0xff]
        %v499 = vld [vmem:[#allocation2 + $0x10] sm:$0xff]
        %v500 = vld [vmem:[#allocation2 + $0x18] sm:$0xff]
        %v501 = vld [vmem:[#allocation2 + $0x20] sm:$0xff]
        %v502 = vld [vmem:[#allocation2 + $0x28] sm:$0xff]
        %504 = vrot.lane.b32.xlu0 %v496, 104
        %v505 = vpop.permute.xlu0 %504
        %vm506 = vcmask 195584
        %v507 = vsel %vm506, %v505, 0
        %509 = vmatprep.subr.mxu0 %v498
        %510 = vmatpush1.msra.mxu0 %v497
        %511 = vmatprep.subr.mxu0 %v500
        %512 = vmatpush1.msra.mxu0 %v499
        %513 = vmatprep.subr.mxu0 %v502
        %514 = vmatpush1.msra.mxu0 %v501
        %515 = vmatprep.subr.mxu0 0.0
        %516 = vmatpush1.msra.mxu0 0.0
        %517 = vmatprep.subr.mxu0 0.0
        %518 = vmatpush1.msra.mxu0 0.0
        %519 = vmatprep.subr.mxu0 0.0
        %520 = vmatpush1.msra.mxu0 0.0
        %521 = vmatprep.subr.mxu0 0.0
        %522 = vmatpush1.msra.mxu0 0.0
        %523 = vmatprep.subr.mxu0 0.0
        %524 = vmatpush1.msra.mxu0 0.0
        %525 = vmatprep.subr.mxu0 0.0
        %526 = vmatpush1.msra.mxu0 0.0
        %527 = vmatprep.subr.mxu0 0.0
        %528 = vmatpush1.msra.mxu0 0.0
        %529 = vmatprep.subr.mxu0 0.0
        %530 = vmatpush1.msra.mxu0 0.0
        %531 = vmatprep.subr.mxu0 0.0
        %532 = vmatpush1.msra.mxu0 0.0
        %533 = vmatprep.subr.mxu0 0.0
        %534 = vmatpush1.msra.mxu0 0.0
        %535 = vmatprep.subr.mxu0 0.0
        %536 = vmatpush1.msra.mxu0 0.0
        %537 = vmatprep.subr.mxu0 0.0
        %538 = vmatpush1.msra.mxu0 0.0
        %539 = vmatprep.subr.mxu0 0.0
        %540 = vmatpush1.msra.mxu0 0.0
        %541 = vmatprep.subr.mxu0 0.0
        %542 = vmatpush1.msra.mxu0 0.0
        %543 = vmatprep.subr.mxu0 0.0
        %544 = vmatpush1.msra.mxu0 0.0
        %545 = vmatprep.subr.mxu0 0.0
        %546 = vmatpush1.msra.mxu0 0.0
        %547 = vmatprep.subr.mxu0 0.0
        %548 = vmatpush1.msra.mxu0 0.0
        %549 = vmatprep.subr.mxu0 0.0
        %550 = vmatpush1.msra.mxu0 0.0
        %551 = vmatprep.subr.mxu0 0.0
        %552 = vmatpush1.msra.mxu0 0.0
        %553 = vmatprep.subr.mxu0 0.0
        %554 = vmatpush1.msra.mxu0 0.0
        %555 = vmatprep.subr.mxu0 0.0
        %556 = vmatpush1.msra.mxu0 0.0
        %557 = vmatprep.subr.mxu0 0.0
        %558 = vmatpush1.msra.mxu0 0.0
        %559 = vmatprep.subr.mxu0 0.0
        %560 = vmatpush1.msra.mxu0 0.0
        %561 = vmatprep.subr.mxu0 0.0
        %562 = vmatpush1.msra.mxu0 0.0
        %563 = vmatprep.subr.mxu0 0.0
        %564 = vmatpush1.msra.mxu0 0.0
        %565 = vmatprep.subr.mxu0 0.0
        %566 = vmatpush1.msra.mxu0 0.0
        %567 = vmatprep.subr.mxu0 0.0
        %568 = vmatpush1.msra.mxu0 0.0
        %569 = vmatprep.subr.mxu0 0.0
        %570 = vmatpush1.msra.mxu0 0.0
        %571 = vmatprep.subr.mxu0 0.0
        %572 = vmatpush1.msra.mxu0 0.0
        %573 = vmatprep.mubr.f32.mxu0 0.0
        %574 = vmatmul.mubr.f32.gmra.mrb[0].mxu0 %v507
        %v575 = vpop.f32.mrb[0].mxu0
        %v576 = vadd.f32 0.0, %v575
        %v577 = vpop.f32.mrb[0].mxu0
        %v578 = vadd.f32 0.0, %v577
        %579 = vdwg.mxu0
        %v580 = vmax.f32 %v576, 0.0
        %v581 = vmax.f32 %v578, 0.0
        %582 = vst [vmem:[#allocation2 + $0x30] sm:$0xff] %v580
        %583 = vst [vmem:[#allocation2 + $0x38] sm:$0xff] %v581
        %v584 = vld [vmem:[%s2] sm:$0xff]
        %v585 = vld [vmem:[#allocation2] sm:$0xff]
        %v586 = vld [vmem:[#allocation2 + $0x8] sm:$0xff]
        %v587 = vld [vmem:[#allocation2 + $0x10] sm:$0xff]
        %v588 = vld [vmem:[#allocation2 + $0x18] sm:$0xff]
        %v589 = vld [vmem:[#allocation2 + $0x20] sm:$0xff]
        %v590 = vld [vmem:[#allocation2 + $0x28] sm:$0xff]
        %v591 = vld [vmem:[#allocation2 + $0x30] sm:$0xff]
        %v592 = vld [vmem:[#allocation2 + $0x38] sm:$0xff]
        %594 = vrot.lane.b32.xlu0 %v584, 80
        %v595 = vpop.permute.xlu0 %594
        %vm596 = vcmask 261120
        %v597 = vsel %vm596, %v595, 0
        %599 = vmatprep.subr.mxu0 %v586
        %600 = vmatpush1.msra.mxu0 %v585
        %601 = vmatprep.subr.mxu0 %v588
        %602 = vmatpush1.msra.mxu0 %v587
        %603 = vmatprep.subr.mxu0 %v590
        %604 = vmatpush1.msra.mxu0 %v589
        %605 = vmatprep.subr.mxu0 %v592
        %606 = vmatpush1.msra.mxu0 %v591
        %607 = vmatprep.subr.mxu0 0.0
        %608 = vmatpush1.msra.mxu0 0.0
        %609 = vmatprep.subr.mxu0 0.0
        %610 = vmatpush1.msra.mxu0 0.0
        %611 = vmatprep.subr.mxu0 0.0
        %612 = vmatpush1.msra.mxu0 0.0
        %613 = vmatprep.subr.mxu0 0.0
        %614 = vmatpush1.msra.mxu0 0.0
        %615 = vmatprep.subr.mxu0 0.0
        %616 = vmatpush1.msra.mxu0 0.0
        %617 = vmatprep.subr.mxu0 0.0
        %618 = vmatpush1.msra.mxu0 0.0
        %619 = vmatprep.subr.mxu0 0.0
        %620 = vmatpush1.msra.mxu0 0.0
        %621 = vmatprep.subr.mxu0 0.0
        %622 = vmatpush1.msra.mxu0 0.0
        %623 = vmatprep.subr.mxu0 0.0
        %624 = vmatpush1.msra.mxu0 0.0
        %625 = vmatprep.subr.mxu0 0.0
        %626 = vmatpush1.msra.mxu0 0.0
        %627 = vmatprep.subr.mxu0 0.0
        %628 = vmatpush1.msra.mxu0 0.0
        %629 = vmatprep.subr.mxu0 0.0
        %630 = vmatpush1.msra.mxu0 0.0
        %631 = vmatprep.subr.mxu0 0.0
        %632 = vmatpush1.msra.mxu0 0.0
        %633 = vmatprep.subr.mxu0 0.0
        %634 = vmatpush1.msra.mxu0 0.0
        %635 = vmatprep.subr.mxu0 0.0
        %636 = vmatpush1.msra.mxu0 0.0
        %637 = vmatprep.subr.mxu0 0.0
        %638 = vmatpush1.msra.mxu0 0.0
        %639 = vmatprep.subr.mxu0 0.0
        %640 = vmatpush1.msra.mxu0 0.0
        %641 = vmatprep.subr.mxu0 0.0
        %642 = vmatpush1.msra.mxu0 0.0
        %643 = vmatprep.subr.mxu0 0.0
        %644 = vmatpush1.msra.mxu0 0.0
        %645 = vmatprep.subr.mxu0 0.0
        %646 = vmatpush1.msra.mxu0 0.0
        %647 = vmatprep.subr.mxu0 0.0
        %648 = vmatpush1.msra.mxu0 0.0
        %649 = vmatprep.subr.mxu0 0.0
        %650 = vmatpush1.msra.mxu0 0.0
        %651 = vmatprep.subr.mxu0 0.0
        %652 = vmatpush1.msra.mxu0 0.0
        %653 = vmatprep.subr.mxu0 0.0
        %654 = vmatpush1.msra.mxu0 0.0
        %655 = vmatprep.subr.mxu0 0.0
        %656 = vmatpush1.msra.mxu0 0.0
        %657 = vmatprep.subr.mxu0 0.0
        %658 = vmatpush1.msra.mxu0 0.0
        %659 = vmatprep.subr.mxu0 0.0
        %660 = vmatpush1.msra.mxu0 0.0
        %661 = vmatprep.subr.mxu0 0.0
        %662 = vmatpush1.msra.mxu0 0.0
        %663 = vmatprep.mubr.f32.mxu0 0.0
        %664 = vmatmul.mubr.f32.gmra.mrb[0].mxu0 %v597
        %v665 = vpop.f32.mrb[0].mxu0
        %v666 = vadd.f32 0.0, %v665
        %v667 = vpop.f32.mrb[0].mxu0
        %v668 = vadd.f32 0.0, %v667
        %669 = vdwg.mxu0
        %v670 = vmax.f32 %v666, 0.0
        %v671 = vmax.f32 %v668, 0.0
        %672 = vst [vmem:[#allocation2 + $0x40] sm:$0xff] %v670
        %673 = vst [vmem:[#allocation2 + $0x48] sm:$0xff] %v671
        %v674 = vld [vmem:[%s2] sm:$0xff]
        %v675 = vld [vmem:[#allocation2] sm:$0xff]
        %v676 = vld [vmem:[#allocation2 + $0x8] sm:$0xff]
        %v677 = vld [vmem:[#allocation2 + $0x10] sm:$0xff]
        %v678 = vld [vmem:[#allocation2 + $0x18] sm:$0xff]
        %v679 = vld [vmem:[#allocation2 + $0x20] sm:$0xff]
        %v680 = vld [vmem:[#allocation2 + $0x28] sm:$0xff]
        %v681 = vld [vmem:[#allocation2 + $0x30] sm:$0xff]
        %v682 = vld [vmem:[#allocation2 + $0x38] sm:$0xff]
        %v683 = vld [vmem:[#allocation2 + $0x40] sm:$0xff]
        %v684 = vld [vmem:[#allocation2 + $0x48] sm:$0xff]
        %686 = vrot.lane.b32.xlu0 %v674, 48
        %v687 = vpop.permute.xlu0 %686
        %vm688 = vcmask 326656
        %v689 = vsel %vm688, %v687, 0
        %691 = vmatprep.subr.mxu0 %v676
        %692 = vmatpush1.msra.mxu0 %v675
        %693 = vmatprep.subr.mxu0 %v678
        %694 = vmatpush1.msra.mxu0 %v677
        %695 = vmatprep.subr.mxu0 %v680
        %696 = vmatpush1.msra.mxu0 %v679
        %697 = vmatprep.subr.mxu0 %v682
        %698 = vmatpush1.msra.mxu0 %v681
        %699 = vmatprep.subr.mxu0 %v684
        %700 = vmatpush1.msra.mxu0 %v683
        %701 = vmatprep.subr.mxu0 0.0
        %702 = vmatpush1.msra.mxu0 0.0
        %703 = vmatprep.subr.mxu0 0.0
        %704 = vmatpush1.msra.mxu0 0.0
        %705 = vmatprep.subr.mxu0 0.0
        %706 = vmatpush1.msra.mxu0 0.0
        %707 = vmatprep.subr.mxu0 0.0
        %708 = vmatpush1.msra.mxu0 0.0
        %709 = vmatprep.subr.mxu0 0.0
        %710 = vmatpush1.msra.mxu0 0.0
        %711 = vmatprep.subr.mxu0 0.0
        %712 = vmatpush1.msra.mxu0 0.0
        %713 = vmatprep.subr.mxu0 0.0
        %714 = vmatpush1.msra.mxu0 0.0
        %715 = vmatprep.subr.mxu0 0.0
        %716 = vmatpush1.msra.mxu0 0.0
        %717 = vmatprep.subr.mxu0 0.0
        %718 = vmatpush1.msra.mxu0 0.0
        %719 = vmatprep.subr.mxu0 0.0
        %720 = vmatpush1.msra.mxu0 0.0
        %721 = vmatprep.subr.mxu0 0.0
        %722 = vmatpush1.msra.mxu0 0.0
        %723 = vmatprep.subr.mxu0 0.0
        %724 = vmatpush1.msra.mxu0 0.0
        %725 = vmatprep.subr.mxu0 0.0
        %726 = vmatpush1.msra.mxu0 0.0
        %727 = vmatprep.subr.mxu0 0.0
        %728 = vmatpush1.msra.mxu0 0.0
        %729 = vmatprep.subr.mxu0 0.0
        %730 = vmatpush1.msra.mxu0 0.0
        %731 = vmatprep.subr.mxu0 0.0
        %732 = vmatpush1.msra.mxu0 0.0
        %733 = vmatprep.subr.mxu0 0.0
        %734 = vmatpush1.msra.mxu0 0.0
        %735 = vmatprep.subr.mxu0 0.0
        %736 = vmatpush1.msra.mxu0 0.0
        %737 = vmatprep.subr.mxu0 0.0
        %738 = vmatpush1.msra.mxu0 0.0
        %739 = vmatprep.subr.mxu0 0.0
        %740 = vmatpush1.msra.mxu0 0.0
        %741 = vmatprep.subr.mxu0 0.0
        %742 = vmatpush1.msra.mxu0 0.0
        %743 = vmatprep.subr.mxu0 0.0
        %744 = vmatpush1.msra.mxu0 0.0
        %745 = vmatprep.subr.mxu0 0.0
        %746 = vmatpush1.msra.mxu0 0.0
        %747 = vmatprep.subr.mxu0 0.0
        %748 = vmatpush1.msra.mxu0 0.0
        %749 = vmatprep.subr.mxu0 0.0
        %750 = vmatpush1.msra.mxu0 0.0
        %751 = vmatprep.subr.mxu0 0.0
        %752 = vmatpush1.msra.mxu0 0.0
        %753 = vmatprep.subr.mxu0 0.0
        %754 = vmatpush1.msra.mxu0 0.0
        %755 = vmatprep.mubr.f32.mxu0 0.0
        %756 = vmatmul.mubr.f32.gmra.mrb[0].mxu0 %v689
        %v757 = vpop.f32.mrb[0].mxu0
        %v758 = vadd.f32 0.0, %v757
        %v759 = vpop.f32.mrb[0].mxu0
        %v760 = vadd.f32 0.0, %v759
        %761 = vdwg.mxu0
        %v770 = vcombine.low %v488, %v490
        %v771 = vcombine.low %v576, %v578
        %v772 = vcombine.low %v666, %v668
        %v773 = vcombine.low %v758, %v760
        %778 = vst [vmem:[%s210] sm:$0xff] %v770
        %779 = vst [vmem:[%s210 + $0x8] sm:$0xff] %v771
        %780 = vst [vmem:[%s210 + $0x10] sm:$0xff] %v772
        %781 = vst [vmem:[%s210 + $0x18] sm:$0xff] %v773
        %s782 = sand.u32 %s113, 1
        %s783 = sand.u32 %s113, 1
        %s784 = smul.addr %s783, 32
        %s785 = scalar_lea.vmem [#allocation3], %s784
        // Predicated region
        $region33: #{cell_forward.1} parent=31 // pred_check
          %p786 = pneg %p123
        $region34: #{cell_forward.1} parent=31 // pred_check_branch
          %788 = sbr.rel (%p786) target = $region36
        $region35: #{cell_forward.1} parent=31 // pred_region
          %s789 = smul.u32 2, %s19
          %s790 = smul.addr %s18, 2
          %s791 = sadd.s32 %s789, %s790
          %s792 = smul.addr %s791, 4
          %s793 = scalar_lea.vmem %s3, %s792
          // Predicated region
          $region37: #{cell_forward.1} parent=35 // pred_check
            _
          $region38: #{cell_forward.1} parent=35 // pred_check_branch
            %795 = sbr.rel (0) target = $region40
          $region39: #{cell_forward.1} parent=35 // pred_region
            // Predicated region
            $region41: #{cell_forward.1} parent=39 // pred_check
              _
            $region42: #{cell_forward.1} parent=39 // pred_check_branch
              %797 = sbr.rel (0) target = $region44
            $region43: #{cell_forward.1} parent=39 // pred_region
              // Predicated region
              $region56: #{cell_forward.1} parent=43 // pred_check
                _
              $region57: #{cell_forward.1} parent=43 // pred_check_branch
                %818 = sbr.rel (0) target = $region59
              $region58: #{cell_forward.1} parent=43 // pred_region
                loop: start=0, step=1, limit=1
                $region60: #{cell_forward.1} parent=58 // loop_pre_header
                  _
                $region61: #{cell_forward.1} parent=58 // loop_header
                  %s820 = sphi 0, %s824
                  %p821 = scmp.ge.s32.totalorder %s820, 1
                  %s825 = sphi %s785, %s785
                  %s826 = sphi %s793, %s793
                $region62: #{cell_forward.1} parent=58 // loop_header_branch
                  %823 = sbr.rel (%p821) target = $region66
                $region63: #{cell_forward.1} parent=58 // loop_body
                  %v827 = vld [vmem:[%s825] sm:$0xff]
                  %828 = vst [vmem:[%s826] sm:$0xff] %v827
                  %v829 = vld [vmem:[%s825 + $0x8] sm:$0xff]
                  %830 = vst [vmem:[%s826 + $0x10] sm:$0xff] %v829
                  %v831 = vld [vmem:[%s825 + $0x10] sm:$0xff]
                  %832 = vst [vmem:[%s826 + $0x20] sm:$0xff] %v831
                  %v833 = vld [vmem:[%s825 + $0x18] sm:$0xff]
                  %834 = vst [vmem:[%s826 + $0x30] sm:$0xff] %v833
                $region64: #{cell_forward.1} parent=58 // loop_footer
                  %s824 = sadd.s32 1, %s820
                $region65: #{cell_forward.1} parent=58 // loop_footer_branch
                  %819 = sbr.rel target = $region61
                $region66: #{cell_forward.1} parent=58 // loop_exit
                  _
              $region59: #{cell_forward.1} parent=43 // pred_fallthru
                _
              // Predicated region
              $region67: #{cell_forward.1} parent=43 // pred_check
                _
              $region68: #{cell_forward.1} parent=43 // pred_check_branch
                %836 = sbr.rel target = $region70
              $region69: #{cell_forward.1} parent=43 // pred_region
                _
              $region70: #{cell_forward.1} parent=43 // pred_fallthru
                _
            $region44: #{cell_forward.1} parent=39 // pred_fallthru
              _
            // Predicated region
            $region45: #{cell_forward.1} parent=39 // pred_check
              _
            $region46: #{cell_forward.1} parent=39 // pred_check_branch
              %799 = sbr.rel target = $region48
            $region47: #{cell_forward.1} parent=39 // pred_region
              loop: start=0, step=1, limit=1
              $region49: #{cell_forward.1} parent=47 // loop_pre_header
                _
              $region50: #{cell_forward.1} parent=47 // loop_header
                %s802 = sphi 0, %s806
                %p803 = scmp.ge.s32.totalorder %s802, 1
                %s807 = sphi %s785, %s785
                %s808 = sphi %s793, %s793
              $region51: #{cell_forward.1} parent=47 // loop_header_branch
                %805 = sbr.rel (%p803) target = $region55
              $region52: #{cell_forward.1} parent=47 // loop_body
                %v809 = vld [vmem:[%s807] sm:$0xff]
                %810 = vst [vmem:[%s808] sm:$0xff] %v809
                %v811 = vld [vmem:[%s807 + $0x8] sm:$0xff]
                %812 = vst [vmem:[%s808 + $0x10] sm:$0xff] %v811
                %v813 = vld [vmem:[%s807 + $0x10] sm:$0xff]
                %814 = vst [vmem:[%s808 + $0x20] sm:$0xff] %v813
                %v815 = vld [vmem:[%s807 + $0x18] sm:$0xff]
                %816 = vst [vmem:[%s808 + $0x30] sm:$0xff] %v815
              $region53: #{cell_forward.1} parent=47 // loop_footer
                %s806 = sadd.s32 1, %s802
              $region54: #{cell_forward.1} parent=47 // loop_footer_branch
                %801 = sbr.rel target = $region50
              $region55: #{cell_forward.1} parent=47 // loop_exit
                _
            $region48: #{cell_forward.1} parent=39 // pred_fallthru
              _
          $region40: #{cell_forward.1} parent=35 // pred_fallthru
            _
          %837 = vnop
        $region36: #{cell_forward.1} parent=31 // pred_fallthru
          _
      $region32: #{cell_forward.1} parent=5 // pred_fallthru
        _
      %p838 = scmp.le.s32.totalorder 2, %s9
      // Predicated region
      $region71: #{cell_forward.1} parent=5 // pred_check
        %p839 = pneg %p838
      $region72: #{cell_forward.1} parent=5 // pred_check_branch
        %841 = sbr.rel (%p839) target = $region74
      $region73: #{cell_forward.1} parent=5 // pred_region
        %s842 = ssub.s32 %s9, 2
        // Predicated region
        $region75: #{cell_forward.1} parent=73 // pred_check
          %p843 = pneg %p129
        $region76: #{cell_forward.1} parent=73 // pred_check_branch
          %845 = sbr.rel (%p843) target = $region78
        $region77: #{cell_forward.1} parent=73 // pred_region
          %s846 = sand.u32 %s114, 1
          %s847 = sand.u32 %s114, 1
          %s848 = smul.addr %s847, 32
          %s849 = scalar_lea.vmem [#allocation3], %s848
        $region78: #{cell_forward.1} parent=73 // pred_fallthru
          _
      $region74: #{cell_forward.1} parent=5 // pred_fallthru
        _
    $region6: #{cell_forward.1} parent=1 // loop_footer
      %s13 = sadd.s32 1, %s9
    $region7: #{cell_forward.1} parent=1 // loop_footer_branch
      %8 = sbr.rel target = $region3
    $region8: #{cell_forward.1} parent=1 // loop_exit
      _

</llo_original>
